<compile_context>
chip_gen: v5e
topology: v5e:2x2
jax: 0.10.0
libtpu: 0.0.40
codegen_flags: <defaults>
</compile_context>

<pallas_src>
import functools

import jax
import jax.numpy as jnp
import numpy as np
from jax.experimental import pallas as pl
from jax.experimental.pallas import tpu as pltpu

_LN_EPS = 1e-5  # PyTorch nn.LayerNorm default


# ----------------------------- in-kernel helpers -----------------------------
def _softmax(x, axis):
    m = jnp.max(x, axis=axis, keepdims=True)
    e = jnp.exp(x - m)
    s = jnp.sum(e, axis=axis, keepdims=True)
    # divide -> EUP approx reciprocal (separate VLIW slot; keeps VALU free)
    return e * pl.reciprocal(s, approx=True)


def _layernorm(x, gamma, beta):
    mean = jnp.mean(x, axis=-1, keepdims=True)
    var = jnp.mean((x - mean) ** 2, axis=-1, keepdims=True)
    return (x - mean) * jax.lax.rsqrt(var + _LN_EPS) * gamma + beta


# ------------------------- stage 1: per-batch context ------------------------
def _context_kernel(x1_ref, x2_ref, rw_ref, cw_ref, *,
                    head_count, key_dim, value_dim):
    """ctxW = stack_i[(softmax_tok(keys_i)^T @ values_i) @ W_i]  ->  [D, 2D] bf16.

    Grid: (B,), fully parallel.  One-time O(N*D*hv + D*hv*2D) work per batch,
    bf16 MXU operands, f32 accumulation.
    """
    hk = key_dim // head_count
    hv = value_dim // head_count
    x1 = x1_ref[0]                                   # values [N, D] f32
    x2 = x2_ref[0]                                   # keys   [N, D] f32
    # softmax over the token axis is column-independent -> one full-width pass.
    k_sm = _softmax(x2, axis=0).astype(jnp.bfloat16)  # [N, D]
    vals = x1.astype(jnp.bfloat16)                    # [N, D]
    for i in range(head_count):
        k = k_sm[:, i * hk:(i + 1) * hk]              # [N, hk]
        v = vals[:, i * hv:(i + 1) * hv]              # [N, hv]
        # context = key^T @ value, contracting dim 0 of both (no XLU transpose)
        ctx = jax.lax.dot_general(
            k, v, (((0,), (0,)), ((), ())),
            preferred_element_type=jnp.float32)       # [hk, hv]
        # fold the 1x1-conv reprojection weight into the context
        cw = jnp.dot(ctx.astype(jnp.bfloat16),
                     rw_ref[i * hv:(i + 1) * hv, :],
                     preferred_element_type=jnp.float32)   # [hk, 2D]
        cw_ref[0, i * hk:(i + 1) * hk, :] = cw.astype(cw_ref.dtype)


# --------------- stage 2: query softmax + attend/reproject + LN --------------
def _attend_kernel(x2_ref, cw_ref, rb_ref, g_ref, b_ref, o_ref, *,
                   head_count, key_dim):
    """Per [TQ, D] query tile: block softmax, one [TQ,D]@[D,2D] matmul, LN.

    Grid: (B, N // q_tile), both axes parallel (no cross-step state).
    """
    hk = key_dim // head_count
    xq = x2_ref[0]                                    # [TQ, D] f32 (queries)
    if head_count == 1:
        q_sm = _softmax(xq, axis=1)
    else:
        # per-head-block softmax over channels
        q_sm = jnp.concatenate(
            [_softmax(xq[:, i * hk:(i + 1) * hk], axis=1)
             for i in range(head_count)], axis=1)
    # single wide MXU matmul against the precomputed ctx@W (bf16 in, f32 acc)
    rep = jnp.dot(q_sm.astype(jnp.bfloat16), cw_ref[0],
                  preferred_element_type=jnp.float32) + rb_ref[...]
    o_ref[0] = _layernorm(rep, g_ref[...], b_ref[...]).astype(o_ref.dtype)


# --------------------------------- wrapper -----------------------------------
def _pick_q_tile(n, max_tile=256, min_steps=4):
    # Largest divisor of N that is a multiple of 16 (bf16 sublane packing),
    # <= max_tile, preferring >= min_steps pipeline stages per batch.
    candidates = [t for t in range(16, min(n, max_tile) + 1, 16) if n % t == 0]
    good = [t for t in candidates if n // t >= min_steps]
    if good:
        return max(good)
    if candidates:
        return max(candidates)
    return n   # fallback: whole axis (block == full dim is always legal)


def cross_attention(x1, x2, params, *, height, width, head_count=1,
                    q_tile=None, out_dtype=jnp.bfloat16):
    B, N, D = x1.shape
    assert N == height * width
    D2 = 2 * D

    if q_tile is None:
        q_tile = _pick_q_tile(N)
    assert N % q_tile == 0
    nq = N // q_tile

    # Cast the reprojection weight to bf16 once in the wrapper (MXU inputs).
    rw_bf16 = params["reproj_w"].astype(jnp.bfloat16)

    # ---- stage 1: per-batch (context @ W), grid fully parallel ---------------
    ctxw = pl.pallas_call(
        functools.partial(_context_kernel, head_count=head_count,
                          key_dim=D, value_dim=D),
        out_shape=jax.ShapeDtypeStruct((B, D, D2), jnp.bfloat16),
        grid=(B,),
        in_specs=[
            pl.BlockSpec((1, N, D), lambda b: (b, 0, 0)),   # x1 (values)
            pl.BlockSpec((1, N, D), lambda b: (b, 0, 0)),   # x2 (keys)
            pl.BlockSpec((D, D2), lambda b: (0, 0)),        # reprojection W (bf16)
        ],
        out_specs=pl.BlockSpec((1, D, D2), lambda b: (b, 0, 0)),
        compiler_params=pltpu.CompilerParams(
            dimension_semantics=("parallel",),
            vmem_limit_bytes=64 * 1024 * 1024),
    )(x1, x2, rw_bf16)

    # ---- stage 2: tiled attend + reprojection + LayerNorm --------------------
    resident = lambda shape: pl.BlockSpec(shape, lambda b, q: (0, 0))
    # NOTE: at deployment sizes D2 is a multiple of 128 -> lane-dense stores.
    out = pl.pallas_call(
        functools.partial(_attend_kernel, head_count=head_count, key_dim=D),
        out_shape=jax.ShapeDtypeStruct((B, N, D2), out_dtype),
        grid=(B, nq),
        in_specs=[
            pl.BlockSpec((1, q_tile, D), lambda b, q: (b, q, 0)),  # query tile
            pl.BlockSpec((1, D, D2), lambda b, q: (b, 0, 0)),      # ctx@W (bf16)
            resident((1, D2)),                                     # reprojection bias
            resident((1, D2)),                                     # LayerNorm gamma
            resident((1, D2)),                                     # LayerNorm beta
        ],
        out_specs=pl.BlockSpec((1, q_tile, D2), lambda b, q: (b, q, 0)),
        compiler_params=pltpu.CompilerParams(
            dimension_semantics=("parallel", "parallel")),
    )(x2, ctxw, params["reproj_b"], params["ln_g"], params["ln_b"])
    return out


# ------------------------------ pure-JAX reference ---------------------------
def cross_attention_ref(x1, x2, params, *, head_count=1):
    B, N, D = x1.shape
    hk = D // head_count
    hv = D // head_count
    keys = jnp.swapaxes(x2, 1, 2)       # [B, D, N]
    queries = keys
    values = jnp.swapaxes(x1, 1, 2)     # [B, D, N]
    heads = []
    for i in range(head_count):
        key = jax.nn.softmax(keys[:, i * hk:(i + 1) * hk, :], axis=2)
        query = jax.nn.softmax(queries[:, i * hk:(i + 1) * hk, :], axis=1)
        value = values[:, i * hv:(i + 1) * hv, :]
        context = key @ jnp.swapaxes(value, 1, 2)                  # [B, hk, hv]
        attended = jnp.swapaxes(context, 1, 2) @ query             # [B, hv, N]
        heads.append(attended)
    agg = jnp.swapaxes(jnp.concatenate(heads, axis=1), 1, 2)       # [B, N, D]
    rep = agg @ params["reproj_w"] + params["reproj_b"]            # [B, N, 2D]
    mean = rep.mean(-1, keepdims=True)
    var = ((rep - mean) ** 2).mean(-1, keepdims=True)
    return (rep - mean) / jnp.sqrt(var + _LN_EPS) * params["ln_g"] + params["ln_b"]


# ----------------------- deterministic synthetic params ----------------------
def init_params(key, in_dim):
    D, D2 = in_dim, 2 * in_dim
    k0, k1, k2, k3 = jax.random.split(key, 4)
    nrm = lambda k, shape: (0.1 * jax.random.normal(k, shape)).astype(jnp.float32)
    return dict(
        # Cross_Attention.reprojection = Conv2d(D, 2D, 1); stored as W[:, :, 0, 0].T
        reproj_w=nrm(k0, (D, D2)),
        reproj_b=nrm(k1, (1, D2)),
        # Cross_Attention.norm = nn.LayerNorm(2D) (affine exercised with randoms)
        ln_g=(1.0 + nrm(k2, (1, D2))).astype(jnp.float32),
        ln_b=nrm(k3, (1, D2)),
    )


if __name__ == "__main__":
    B, D, H, W = 2, 16, 8, 8            # key_channels = value_channels = 16, N = 64
    N = H * W
    key = jax.random.PRNGKey(0)
    kx1, kx2, kp = jax.random.split(key, 3)
    x1 = jax.random.normal(kx1, (B, N, D), dtype=jnp.float32)
    x2 = jax.random.normal(kx2, (B, N, D), dtype=jnp.float32)
    params = init_params(kp, D)

    out = cross_attention(x1, x2, params, height=H, width=W, head_count=1)
    jax.block_until_ready(out)
    assert out.shape == (B, N, 2 * D)

    ref = cross_attention_ref(x1, x2, params, head_count=1)
    # bf16 output + bf16 MXU operands + approx reciprocal -> ~1e-2 level error
    np.testing.assert_allclose(np.asarray(out, dtype=np.float32),
                               np.asarray(ref), atol=5e-2, rtol=5e-2)
    print("KERNEL_OK")
</pallas_src>

<mosaic_0001>
module attributes {stable_mosaic.version = 11 : i64} {
  func.func @_context_kernel(%arg0: i32, %arg1: memref<1x64x16xf32, #tpu.memory_space<vmem>>, %arg2: memref<1x64x16xf32, #tpu.memory_space<vmem>>, %arg3: memref<16x32xbf16, #tpu.memory_space<vmem>>, %arg4: memref<1x16x32xbf16, #tpu.memory_space<vmem>>) attributes {dimension_semantics = [#tpu.dimension_semantics<parallel>], iteration_bounds = array<i64: 2>, scalar_prefetch = 0 : i64, scratch_operands = 0 : i64, tpu.core_type = #tpu.core_type<tc>, window_params = [{transform_indices = @transform_0, window_bounds = array<i64: 1, 64, 16>}, {transform_indices = @transform_1, window_bounds = array<i64: 1, 64, 16>}, {pipeline_mode = #tpu.pipeline_mode<synchronous>, transform_indices = @transform_2, window_bounds = array<i64: 16, 32>}, {transform_indices = @transform_3, window_bounds = array<i64: 1, 16, 32>}]} {
    %c0 = arith.constant 0 : index
    %c0_0 = arith.constant 0 : index
    %c0_1 = arith.constant 0 : index
    %0 = vector.load %arg1[%c0, %c0_0, %c0_1] : memref<1x64x16xf32, #tpu.memory_space<vmem>>, vector<1x64x16xf32>
    %1 = vector.shape_cast %0 : vector<1x64x16xf32> to vector<64x16xf32>
    %c0_2 = arith.constant 0 : index
    %c0_3 = arith.constant 0 : index
    %c0_4 = arith.constant 0 : index
    %2 = vector.load %arg2[%c0_2, %c0_3, %c0_4] : memref<1x64x16xf32, #tpu.memory_space<vmem>>, vector<1x64x16xf32>
    %3 = vector.shape_cast %2 : vector<1x64x16xf32> to vector<64x16xf32>
    %cst = arith.constant dense<0xFF800000> : vector<16xf32>
    %4 = vector.multi_reduction <maximumf>, %3, %cst [0] : vector<64x16xf32> to vector<16xf32>
    %5 = vector.shape_cast %4 : vector<16xf32> to vector<1x16xf32>
    %6 = vector.broadcast %5 : vector<1x16xf32> to vector<64x16xf32>
    %7 = arith.subf %3, %6 : vector<64x16xf32>
    %8 = math.exp %7 : vector<64x16xf32>
    %cst_5 = arith.constant dense<0.000000e+00> : vector<16xf32>
    %9 = vector.multi_reduction <add>, %8, %cst_5 [0] : vector<64x16xf32> to vector<16xf32>
    %10 = vector.shape_cast %9 : vector<16xf32> to vector<1x16xf32>
    %11 = tpu.reciprocal %10 {approx = true} : vector<1x16xf32> -> vector<1x16xf32>
    %12 = vector.broadcast %11 : vector<1x16xf32> to vector<64x16xf32>
    %13 = arith.mulf %8, %12 : vector<64x16xf32>
    %14 = arith.truncf %13 : vector<64x16xf32> to vector<64x16xbf16>
    %15 = arith.truncf %1 : vector<64x16xf32> to vector<64x16xbf16>
    %cst_6 = arith.constant dense<0.000000e+00> : vector<16x16xf32>
    %16 = tpu.matmul %14, %15, %cst_6 {dimension_numbers = #tpu.dot_dimension_numbers<[0], [0], [1], [1], [0, 1, 1, 1], [], []>} : vector<64x16xbf16>, vector<64x16xbf16>, vector<16x16xf32> -> vector<16x16xf32>
    %17 = arith.truncf %16 : vector<16x16xf32> to vector<16x16xbf16>
    %c0_7 = arith.constant 0 : index
    %c0_8 = arith.constant 0 : index
    %18 = vector.load %arg3[%c0_7, %c0_8] : memref<16x32xbf16, #tpu.memory_space<vmem>>, vector<16x32xbf16>
    %cst_9 = arith.constant dense<0.000000e+00> : vector<16x32xf32>
    %19 = tpu.matmul %17, %18, %cst_9 {dimension_numbers = #tpu.dot_dimension_numbers<[1], [0], [0], [1], [0, 0, 1, 1], [], []>} : vector<16x16xbf16>, vector<16x32xbf16>, vector<16x32xf32> -> vector<16x32xf32>
    %20 = arith.truncf %19 : vector<16x32xf32> to vector<16x32xbf16>
    %c0_10 = arith.constant 0 : index
    %c0_11 = arith.constant 0 : index
    %c0_12 = arith.constant 0 : index
    %21 = vector.load %arg4[%c0_10, %c0_11, %c0_12] : memref<1x16x32xbf16, #tpu.memory_space<vmem>>, vector<1x16x32xbf16>
    %22 = vector.shape_cast %21 : vector<1x16x32xbf16> to vector<16x32xbf16>
    %23 = vector.shape_cast %20 : vector<16x32xbf16> to vector<1x16x32xbf16>
    tpu.vector_store %arg4[%c0_10, %c0_11, %c0_12], %23 {strides = array<i32>} : memref<1x16x32xbf16, #tpu.memory_space<vmem>>, vector<1x16x32xbf16>,
    return
  }
  func.func @transform_0(%arg0: i32) -> (i32, i32, i32) {
    %c0_i32 = arith.constant 0 : i32
    %c0_i32_0 = arith.constant 0 : i32
    %c0_i32_1 = arith.constant 0 : i32
    return %arg0, %c0_i32, %c0_i32_0 : i32, i32, i32
  }
  func.func @transform_1(%arg0: i32) -> (i32, i32, i32) {
    %c0_i32 = arith.constant 0 : i32
    %c0_i32_0 = arith.constant 0 : i32
    %c0_i32_1 = arith.constant 0 : i32
    return %arg0, %c0_i32, %c0_i32_0 : i32, i32, i32
  }
  func.func @transform_2(%arg0: i32) -> (i32, i32) {
    %c0_i32 = arith.constant 0 : i32
    %c0_i32_0 = arith.constant 0 : i32
    %c0_i32_1 = arith.constant 0 : i32
    return %c0_i32, %c0_i32_0 : i32, i32
  }
  func.func @transform_3(%arg0: i32) -> (i32, i32, i32) {
    %c0_i32 = arith.constant 0 : i32
    %c0_i32_0 = arith.constant 0 : i32
    %c0_i32_1 = arith.constant 0 : i32
    return %arg0, %c0_i32, %c0_i32_0 : i32, i32, i32
  }
}

</mosaic_0001>

<llo_original>
// kernel: tpu_custom_call.1
$region0: #{tpu_custom_call.1}
  #allocation0 [shape = 'u32[]', space=smem, size = 0x4, offset = 0x4, fixed_abs, tag = 'smem constant byte address 0x4 - core index']
  #allocation1 [shape = 'u32[72,128]{1,0:T(1,128)}', space=vmem, size = 0x9000, scoped, tag = 'internal scratch']
  %s0 = inlined_call_operand.vmem [shape: f32[2,64,16], index: 0, kind: input, shape index: {}]
  %s1 = inlined_call_operand.vmem [shape: f32[2,64,16], index: 1, kind: input, shape index: {}]
  %s2 = inlined_call_operand.vmem [shape: bf16[16,32], index: 2, kind: input, shape index: {}]
  %s3 = inlined_call_operand.hbm [shape: bf16[2,16,32], index: 3, kind: output, shape index: {}]
  %s4 = sld [smem:[#allocation0]]
  $region45: #{tpu_custom_call.1} parent=0
    _
  %s6 = ssub.s32 1, %s4
  %s7 = scalar_select 0, %s6, %s4
  $region1: #{tpu_custom_call.1} parent=0
    #allocation2 [shape = 'u8[8192]{0}', space=vmem, size = 0x2000, scoped, tag = 'output window, operand 0']
    #allocation3 [shape = 's32[2]{0}', space=sflag, size = 0x8, scoped, tag = 'scoped memory for tpu_custom_call.1']
    %8 = vsyncpa [#allocation3], 0
    %s9 = scalar_lea.sflag [#allocation3], 1
    %10 = vsyncpa %s9, 0
    loop: start=0, step=1, limit=4
    $region2: #{tpu_custom_call.1} parent=1 // loop_pre_header
      _
    $region3: #{tpu_custom_call.1} parent=1 // loop_header
      %s12 = sphi 0, %s16
      %p13 = scmp.ge.s32.totalorder %s12, 4
      %s22 = sphi 0, %s24
      %s25 = sphi 0, %s22
      %s26 = sphi 0, %s25
      %s42 = sphi 0, %s26
      %s48 = sphi 0, %s50
      %s51 = sphi 0, %s48
      %s52 = sphi 0, %s51
      %s68 = sphi 0, %s52
      %s72 = sphi 0, %s72
      %s74 = sphi 0, %s72
      %s75 = sphi 0, %s74
      %s89 = sphi 0, %s75
      %s95 = sphi 0, %s97
      %s98 = sphi 0, %s95
      %s99 = sphi 0, %s98
      %s115 = sphi 0, %s99
    $region4: #{tpu_custom_call.1} parent=1 // loop_header_branch
      %15 = sbr.rel (%p13) target = $region8
    $region5: #{tpu_custom_call.1} parent=1 // loop_body
      %s17 = ssub.s32 %s12, 1
      %s18 = ssub.s32 %s12, 2
      %s19 = sadd.s32 %s12, 1
      %s20 = ssub.s32 %s12, %s19
      %p21 = scmp.eq.s32.totalorder %s20, 0
      %s23 = sadd.s32 %s22, 1
      %s24 = scalar_select %p21, %s22, %s23
      %p27 = pneg %p21
      %p28 = scmp.eq.s32.totalorder %s12, 1
      %p29 = por %p27, %p28
      %p30 = scmp.ne.s32.totalorder %s22, %s25
      %p31 = scmp.eq.s32.totalorder %s12, 0
      %p32 = por %p30, %p31
      %p33 = scmp.ne.s32.totalorder %s22, %s25
      %p34 = scmp.eq.s32.totalorder %s17, 1
      %p35 = por %p33, %p34
      %p36 = scmp.ne.s32.totalorder %s25, %s26
      %p37 = scmp.eq.s32.totalorder %s17, 0
      %p38 = por %p36, %p37
      %p39 = scmp.ne.s32.totalorder %s25, %s26
      %p40 = scmp.eq.s32.totalorder %s18, 1
      %p41 = por %p39, %p40
      %p43 = scmp.ne.s32.totalorder %s26, %s42
      %p44 = scmp.eq.s32.totalorder %s18, 0
      %p45 = por %p43, %p44
      %s46 = ssub.s32 %s12, %s19
      %p47 = scmp.eq.s32.totalorder %s46, 0
      %s49 = sadd.s32 %s48, 1
      %s50 = scalar_select %p47, %s48, %s49
      %p53 = pneg %p47
      %p54 = scmp.eq.s32.totalorder %s12, 1
      %p55 = por %p53, %p54
      %p56 = scmp.ne.s32.totalorder %s48, %s51
      %p57 = scmp.eq.s32.totalorder %s12, 0
      %p58 = por %p56, %p57
      %p59 = scmp.ne.s32.totalorder %s48, %s51
      %p60 = scmp.eq.s32.totalorder %s17, 1
      %p61 = por %p59, %p60
      %p62 = scmp.ne.s32.totalorder %s51, %s52
      %p63 = scmp.eq.s32.totalorder %s17, 0
      %p64 = por %p62, %p63
      %p65 = scmp.ne.s32.totalorder %s51, %s52
      %p66 = scmp.eq.s32.totalorder %s18, 1
      %p67 = por %p65, %p66
      %p69 = scmp.ne.s32.totalorder %s52, %s68
      %p70 = scmp.eq.s32.totalorder %s18, 0
      %p71 = por %p69, %p70
      %s73 = sadd.s32 %s72, 1
      %p76 = scmp.eq.s32.totalorder %s12, 1
      %p77 = scmp.ne.s32.totalorder %s72, %s74
      %p78 = scmp.eq.s32.totalorder %s12, 0
      %p79 = por %p77, %p78
      %p80 = scmp.ne.s32.totalorder %s72, %s74
      %p81 = scmp.eq.s32.totalorder %s17, 1
      %p82 = por %p80, %p81
      %p83 = scmp.ne.s32.totalorder %s74, %s75
      %p84 = scmp.eq.s32.totalorder %s17, 0
      %p85 = por %p83, %p84
      %p86 = scmp.ne.s32.totalorder %s74, %s75
      %p87 = scmp.eq.s32.totalorder %s18, 1
      %p88 = por %p86, %p87
      %p90 = scmp.ne.s32.totalorder %s75, %s89
      %p91 = scmp.eq.s32.totalorder %s18, 0
      %p92 = por %p90, %p91
      %s93 = ssub.s32 %s12, %s19
      %p94 = scmp.eq.s32.totalorder %s93, 0
      %s96 = sadd.s32 %s95, 1
      %s97 = scalar_select %p94, %s95, %s96
      %p100 = pneg %p94
      %p101 = scmp.eq.s32.totalorder %s12, 1
      %p102 = por %p100, %p101
      %p103 = scmp.ne.s32.totalorder %s95, %s98
      %p104 = scmp.eq.s32.totalorder %s12, 0
      %p105 = por %p103, %p104
      %p106 = scmp.ne.s32.totalorder %s95, %s98
      %p107 = scmp.eq.s32.totalorder %s17, 1
      %p108 = por %p106, %p107
      %p109 = scmp.ne.s32.totalorder %s98, %s99
      %p110 = scmp.eq.s32.totalorder %s17, 0
      %p111 = por %p109, %p110
      %p112 = scmp.ne.s32.totalorder %s98, %s99
      %p113 = scmp.eq.s32.totalorder %s18, 1
      %p114 = por %p112, %p113
      %p116 = scmp.ne.s32.totalorder %s99, %s115
      %p117 = scmp.eq.s32.totalorder %s18, 0
      %p118 = por %p116, %p117
      %p119 = scmp.le.s32.totalorder 1, %s12
      %p120 = scmp.lt.s32.totalorder %s12, 3
      %p121 = pnand %p119, %p120
      %p122 = pneg %p121
      // Predicated region
      $region9: #{tpu_custom_call.1} parent=5 // pred_check
        _
      $region10: #{tpu_custom_call.1} parent=5 // pred_check_branch
        %124 = sbr.rel (%p121) target = $region12
      $region11: #{tpu_custom_call.1} parent=5 // pred_region
        %s125 = ssub.s32 %s12, 1
        // Predicated region
        $region13: #{tpu_custom_call.1} parent=11 // pred_check
          %p126 = pneg %p85
        $region14: #{tpu_custom_call.1} parent=11 // pred_check_branch
          %128 = sbr.rel (%p126) target = $region16
        $region15: #{tpu_custom_call.1} parent=11 // pred_region
          _
        $region16: #{tpu_custom_call.1} parent=11 // pred_fallthru
          _
      $region12: #{tpu_custom_call.1} parent=5 // pred_fallthru
        _
      %p129 = scmp.lt.s32.totalorder %s12, 2
      // Predicated region
      $region17: #{tpu_custom_call.1} parent=5 // pred_check
        %p130 = pneg %p129
      $region18: #{tpu_custom_call.1} parent=5 // pred_check_branch
        %132 = sbr.rel (%p130) target = $region20
      $region19: #{tpu_custom_call.1} parent=5 // pred_region
        // Predicated region
        $region21: #{tpu_custom_call.1} parent=19 // pred_check
          %p133 = pneg %p32
        $region22: #{tpu_custom_call.1} parent=19 // pred_check_branch
          %135 = sbr.rel (%p133) target = $region24
        $region23: #{tpu_custom_call.1} parent=19 // pred_region
          %p136 = scmp.lt.s32.totalorder %s12, 1
          %s137 = scalar_select %p136, %s12, 1
          %s138 = smul.addr %s137, 8
          %s139 = smul.addr %s138, 8
          %s140 = scalar_lea.vmem %s0, %s139
        $region24: #{tpu_custom_call.1} parent=19 // pred_fallthru
          _
        // Predicated region
        $region25: #{tpu_custom_call.1} parent=19 // pred_check
          %p141 = pneg %p58
        $region26: #{tpu_custom_call.1} parent=19 // pred_check_branch
          %143 = sbr.rel (%p141) target = $region28
        $region27: #{tpu_custom_call.1} parent=19 // pred_region
          %p144 = scmp.lt.s32.totalorder %s12, 1
          %s145 = scalar_select %p144, %s12, 1
          %s146 = smul.addr %s145, 8
          %s147 = smul.addr %s146, 8
          %s148 = scalar_lea.vmem %s1, %s147
        $region28: #{tpu_custom_call.1} parent=19 // pred_fallthru
          _
      $region20: #{tpu_custom_call.1} parent=5 // pred_fallthru
        _
      %p149 = scmp.le.s32.totalorder 1, %s12
      %p150 = scmp.lt.s32.totalorder %s12, 3
      %p151 = pnand %p149, %p150
      %p152 = pneg %p151
      // Predicated region
      $region29: #{tpu_custom_call.1} parent=5 // pred_check
        _
      $region30: #{tpu_custom_call.1} parent=5 // pred_check_branch
        %154 = sbr.rel (%p151) target = $region32
      $region31: #{tpu_custom_call.1} parent=5 // pred_region
        %s155 = ssub.s32 %s12, 1
        %p156 = scmp.lt.s32.totalorder %s17, 1
        %s157 = scalar_select %p156, %s17, 1
        %s158 = smul.addr %s157, 8
        %s159 = smul.addr %s158, 8
        %s160 = scalar_lea.vmem %s0, %s159
        %p161 = pneg %p38
        %p162 = pneg %p35
        %p163 = scmp.lt.s32.totalorder %s17, 1
        %s164 = scalar_select %p163, %s17, 1
        %s165 = smul.addr %s164, 8
        %s166 = smul.addr %s165, 8
        %s167 = scalar_lea.vmem %s1, %s166
        %p168 = pneg %p64
        %p169 = pneg %p61
        %p170 = pneg %p85
        %p171 = pneg %p82
        %p172 = pneg %p111
        %p173 = pneg %p108
        %s174 = sand.u32 %s98, 1
        %s175 = scalar_lea.sflag [#allocation3], %s174
        %s176 = sand.u32 %s98, 1
        %s177 = smul.addr %s176, 8
        %s178 = scalar_lea.vmem [#allocation2], %s177
        %p179 = scmp.lt.s32.totalorder %s17, 1
        %s180 = scalar_select %p179, %s17, 1
        %s181 = smul.addr %s180, 8
        %s182 = smul.addr %s181, 8
        %s183 = scalar_lea.vmem %s0, %s182
        %p184 = scmp.lt.s32.totalorder %s17, 1
        %s185 = scalar_select %p184, %s17, 1
        %s186 = smul.addr %s185, 8
        %s187 = smul.addr %s186, 8
        %s188 = scalar_lea.vmem %s1, %s187
        %v190 = vld [vmem:[%s183] sm:$0xff]
        %v191 = vld [vmem:[%s183 + $0x8] sm:$0xff]
        %v192 = vld [vmem:[%s183 + $0x10] sm:$0xff]
        %v193 = vld [vmem:[%s183 + $0x18] sm:$0xff]
        %v194 = vld [vmem:[%s183 + $0x20] sm:$0xff]
        %v195 = vld [vmem:[%s183 + $0x28] sm:$0xff]
        %v196 = vld [vmem:[%s183 + $0x30] sm:$0xff]
        %v197 = vld [vmem:[%s183 + $0x38] sm:$0xff]
        %v198 = vld [vmem:[%s188] sm:$0xff]
        %v199 = vld [vmem:[%s188 + $0x8] sm:$0xff]
        %v200 = vld [vmem:[%s188 + $0x10] sm:$0xff]
        %v201 = vld [vmem:[%s188 + $0x18] sm:$0xff]
        %v202 = vld [vmem:[%s188 + $0x20] sm:$0xff]
        %v203 = vld [vmem:[%s188 + $0x28] sm:$0xff]
        %v204 = vld [vmem:[%s188 + $0x30] sm:$0xff]
        %v205 = vld [vmem:[%s188 + $0x38] sm:$0xff]
        %vm206 = vcmask 130048
        %v207 = vsel %vm206, %v198, -inf
        %v208 = vsel %vm206, %v199, -inf
        %v209 = vsel %vm206, %v200, -inf
        %v210 = vsel %vm206, %v201, -inf
        %v211 = vsel %vm206, %v202, -inf
        %v212 = vmax.f32 %v207, %v211
        %v213 = vsel %vm206, %v203, -inf
        %v214 = vmax.f32 %v208, %v213
        %v215 = vsel %vm206, %v204, -inf
        %v216 = vmax.f32 %v209, %v215
        %v217 = vsel %vm206, %v205, -inf
        %v218 = vmax.f32 %v210, %v217
        %v219 = vmax.f32 %v212, %v214
        %v220 = vmax.f32 %v216, %v218
        %v221 = vmax.f32 %v219, %v220
        %v222 = vrot.slane %v221, 4
        %v223 = vmax.f32 %v221, %v222
        %v224 = vrot.slane %v223, 2
        %v225 = vmax.f32 %v223, %v224
        %v226 = vrot.slane %v225, 1
        %v227 = vmax.f32 %v225, %v226
        %v228 = vsub.f32 %v198, %v227
        %v229 = vsub.f32 %v199, %v227
        %v230 = vsub.f32 %v200, %v227
        %v231 = vsub.f32 %v201, %v227
        %v232 = vsub.f32 %v202, %v227
        %v233 = vsub.f32 %v203, %v227
        %v234 = vsub.f32 %v204, %v227
        %v235 = vsub.f32 %v205, %v227
        %v236 = vmul.f32 %v228, 1.442695
        %v237 = vpow.pop %v236
        %v238 = vmul.f32 %v229, 1.442695
        %v239 = vpow.pop %v238
        %v240 = vmul.f32 %v230, 1.442695
        %v241 = vpow.pop %v240
        %v242 = vmul.f32 %v231, 1.442695
        %v243 = vpow.pop %v242
        %v244 = vmul.f32 %v232, 1.442695
        %v245 = vpow.pop %v244
        %v246 = vmul.f32 %v233, 1.442695
        %v247 = vpow.pop %v246
        %v248 = vmul.f32 %v234, 1.442695
        %v249 = vpow.pop %v248
        %v250 = vmul.f32 %v235, 1.442695
        %v251 = vpow.pop %v250
        %v252 = vsel %vm206, %v237, 0.0
        %v253 = vsel %vm206, %v239, 0.0
        %v254 = vadd.f32 %v252, %v253
        %v255 = vsel %vm206, %v241, 0.0
        %v256 = vadd.f32 %v254, %v255
        %v257 = vsel %vm206, %v243, 0.0
        %v258 = vadd.f32 %v256, %v257
        %v259 = vsel %vm206, %v245, 0.0
        %v260 = vadd.f32 %v258, %v259
        %v261 = vsel %vm206, %v247, 0.0
        %v262 = vadd.f32 %v260, %v261
        %v263 = vsel %vm206, %v249, 0.0
        %v264 = vadd.f32 %v262, %v263
        %v265 = vsel %vm206, %v251, 0.0
        %v266 = vadd.f32 %v264, %v265
        %v267 = vrot.slane %v266, 4
        %v268 = vadd.f32 %v266, %v267
        %v269 = vrot.slane %v268, 2
        %v270 = vadd.f32 %v268, %v269
        %v271 = vrot.slane %v270, 1
        %v272 = vadd.f32 %v270, %v271
        %v273 = vrcp.pop %v272
        %v274 = vmul.f32 %v237, %v273
        %v275 = vmul.f32 %v239, %v273
        %v276 = vmul.f32 %v241, %v273
        %v277 = vmul.f32 %v243, %v273
        %v278 = vmul.f32 %v245, %v273
        %v279 = vmul.f32 %v247, %v273
        %v280 = vmul.f32 %v249, %v273
        %v281 = vmul.f32 %v251, %v273
        %v282 = vpack.c.bf16 %v275, %v274
        %v283 = vpack.c.bf16 %v277, %v276
        %v284 = vpack.c.bf16 %v279, %v278
        %v285 = vpack.c.bf16 %v281, %v280
        %v286 = vpack.c.bf16 %v191, %v190
        %v287 = vpack.c.bf16 %v193, %v192
        %v288 = vpack.c.bf16 %v195, %v194
        %v289 = vpack.c.bf16 %v197, %v196
        %290 = vxpose.xlu0.c.b16.start [1/8] %v282, 128
        %291 = vxpose.xlu0.c.b16.cont [2/8] %v283, 128
        %292 = vxpose.xlu0.c.b16.cont [3/8] %v284, 128
        %293 = vxpose.xlu0.c.b16.cont [4/8] %v285, 128
        %294 = vxpose.xlu0.c.b16.cont [5/8] 0, 128
        %295 = vxpose.xlu0.c.b16.cont [6/8] 0, 128
        %296 = vxpose.xlu0.c.b16.cont [7/8] 0, 128
        %297 = vxpose.xlu0.c.b16.end [8/8] 0, 128
        %v298 = vpop.trf.xlu0
        %v299 = vpop.trf.xlu0
        %v300 = vpop.trf.xlu0
        %v301 = vpop.trf.xlu0
        %v302 = vpop.trf.xlu0
        %v303 = vpop.trf.xlu0
        %v304 = vpop.trf.xlu0
        %v305 = vpop.trf.xlu0
        %vm306 = vcmask 523264
        %v308 = vsel %vm306, %v298, 0
        %310 = vmatpush.bf16.msra.mxu0 0
        %311 = vmatpush.bf16.msra.mxu0 0
        %312 = vmatpush.bf16.msra.mxu0 0
        %313 = vmatpush.bf16.msra.mxu0 0
        %314 = vmatpush.bf16.msra.mxu0 %v289
        %315 = vmatpush.bf16.msra.mxu0 %v288
        %316 = vmatpush.bf16.msra.mxu0 %v287
        %317 = vmatpush.bf16.msra.mxu0 %v286
        %318 = vmatmul.bf16.gmra.mxu0 %v308
        %v319 = vpop.f32.mrf.mxu0
        %v320 = vadd.f32 0.0, %v319
        %v321 = vpop.f32.mrf.mxu0
        %v322 = vadd.f32 0.0, %v321
        %323 = vdwg.mxu0
        %v324 = vpack.c.bf16 %v322, %v320
        %v325 = vld [vmem:[%s2] sm:$0xf]
        %v326 = vld [vmem:[%s2 + $0x4] sm:$0xf]
        %v329 = vunpack.c.l.b16 %v325
        %v330 = vunpack.c.l.b16 %v326
        %v331 = vpack.c.b16 %v330, %v329
        %v334 = vsel %vm206, %v324, 0
        %336 = vmatpush.bf16.msra.mxu0 0
        %337 = vmatpush.bf16.msra.mxu0 0
        %338 = vmatpush.bf16.msra.mxu0 0
        %339 = vmatpush.bf16.msra.mxu0 0
        %340 = vmatpush.bf16.msra.mxu0 0
        %341 = vmatpush.bf16.msra.mxu0 0
        %342 = vmatpush.bf16.msra.mxu0 0
        %343 = vmatpush.bf16.msra.mxu0 %v331
        %344 = vmatmul.bf16.gmra.mxu0 %v334
        %v345 = vpop.f32.mrf.mxu0
        %v346 = vadd.f32 0.0, %v345
        %v347 = vpop.f32.mrf.mxu0
        %v348 = vadd.f32 0.0, %v347
        %349 = vdwg.mxu0
        %v350 = vpack.c.bf16 %v346, %v346
        %v351 = vpack.c.bf16 %v348, %v348
        %vm352 = vcmask 257024
        %353 = vst.msk [vmem:[%s178] sm:$0xf] %vm352, %v350
        %354 = vst.msk [vmem:[%s178 + $0x4] sm:$0xf] %vm352, %v351
        %s355 = sand.u32 %s98, 1
        %s356 = scalar_lea.sflag [#allocation3], %s355
        %s357 = sand.u32 %s98, 1
        %s358 = smul.addr %s357, 8
        %s359 = scalar_lea.vmem [#allocation2], %s358
        // Predicated region
        $region33: #{tpu_custom_call.1} parent=31 // pred_check
          %p360 = pneg %p108
        $region34: #{tpu_custom_call.1} parent=31 // pred_check_branch
          %362 = sbr.rel (%p360) target = $region36
        $region35: #{tpu_custom_call.1} parent=31 // pred_region
          %364 = vsyncadd %s356, 0
          %s365 = smul.addr %s17, 2
          %s366 = smul.addr %s365, 4
          %s367 = scalar_lea.hbm %s3, %s366
          %s368 = sshll.u32 %s359, 4
          %s369 = int_to_ptr.vmem [resolvable:$true] %s368
          %s370 = sshll.u32 %s367, 4
          %s371 = int_to_ptr.hbm [resolvable:$true] %s370
          %376 = dma.vmem_to_hbm [thread:$0]  %s369, 128, %s371, %s356, 64, 64, 4
        $region36: #{tpu_custom_call.1} parent=31 // pred_fallthru
          _
      $region32: #{tpu_custom_call.1} parent=5 // pred_fallthru
        _
      %p377 = scmp.le.s32.totalorder 2, %s12
      // Predicated region
      $region37: #{tpu_custom_call.1} parent=5 // pred_check
        %p378 = pneg %p377
      $region38: #{tpu_custom_call.1} parent=5 // pred_check_branch
        %380 = sbr.rel (%p378) target = $region40
      $region39: #{tpu_custom_call.1} parent=5 // pred_region
        %s381 = ssub.s32 %s12, 2
        // Predicated region
        $region41: #{tpu_custom_call.1} parent=39 // pred_check
          %p382 = pneg %p114
        $region42: #{tpu_custom_call.1} parent=39 // pred_check_branch
          %384 = sbr.rel (%p382) target = $region44
        $region43: #{tpu_custom_call.1} parent=39 // pred_region
          %s385 = sand.u32 %s99, 1
          %s386 = scalar_lea.sflag [#allocation3], %s385
          %s387 = sand.u32 %s99, 1
          %s388 = smul.addr %s387, 8
          %s389 = scalar_lea.vmem [#allocation2], %s388
          %391 = dma.done %s386, 128
        $region44: #{tpu_custom_call.1} parent=39 // pred_fallthru
          _
      $region40: #{tpu_custom_call.1} parent=5 // pred_fallthru
        _
    $region6: #{tpu_custom_call.1} parent=1 // loop_footer
      %s16 = sadd.s32 1, %s12
    $region7: #{tpu_custom_call.1} parent=1 // loop_footer_branch
      %11 = sbr.rel target = $region3
    $region8: #{tpu_custom_call.1} parent=1 // loop_exit
      _
    %392 = vsyncpa [#allocation3], 1
    %s393 = scalar_lea.sflag [#allocation3], 1
    %394 = vsyncpa %s393, 1

</llo_original>
